<compile_context>
chip_gen: v6e
topology: v6e:2x2x1
jax: 0.10.0
libtpu: 0.0.40
codegen_flags: <defaults>
</compile_context>

<pallas_src>
import jax
import jax.numpy as jnp
from jax.experimental import pallas as pl
from jax.experimental.pallas import tpu as pltpu

LANE = 128
HIDDEN = 128        # lane-dense padded width used for all hidden layers


def _round_up(x, m):
    return ((x + m - 1) // m) * m


def _leaky_relu(x, slope=0.1):
    return jnp.where(x > 0, x, slope * x)


def _pad2(a, rows, cols):
    r, c = a.shape
    return jnp.pad(a, ((0, rows - r), (0, cols - c)))


def mlp_kernel(x_ref, w1_ref, b1_ref, w2_ref, b2_ref, w3_ref, b3_ref,
               w4_ref, b4_ref, o_ref):
    """Fused eval-mode 4-layer MLP for one batch tile.

    All layers are lane-dense (128-wide, zero-padded). Matmul inputs are bf16 (MXU),
    accumulation + bias + LeakyReLU stay f32. Dropout(0.3) is identity at inference.
    Output is stored bf16 to halve HBM writeback.
    """
    x = x_ref[...]                                                  # (TILE_B, D_in) bf16

    h = jnp.dot(x, w1_ref[...], preferred_element_type=jnp.float32) + b1_ref[...]
    h = _leaky_relu(h)                                              # f32 (TILE_B, 128)

    h = jnp.dot(h.astype(jnp.bfloat16), w2_ref[...],
                preferred_element_type=jnp.float32) + b2_ref[...]
    h = _leaky_relu(h)                                              # f32 (TILE_B, 128)

    h = jnp.dot(h.astype(jnp.bfloat16), w3_ref[...],
                preferred_element_type=jnp.float32) + b3_ref[...]
    h = _leaky_relu(h)                                              # f32 (TILE_B, 128)

    out = jnp.dot(h.astype(jnp.bfloat16), w4_ref[...],
                  preferred_element_type=jnp.float32) + b4_ref[...]
    o_ref[...] = out.astype(o_ref.dtype)                            # bf16 (TILE_B, 128)


def disease_classifier_forward(x, params, tile_b=2048):
    """x: (B, input_dim) float32. params: w1..w4 as (in, out), b1..b4 as (1, out), all f32.

    Returns (B, num_classes) float32 logits.
    """
    B, input_dim = x.shape
    num_classes = params["w4"].shape[1]

    n_pad = _round_up(max(num_classes, LANE), LANE)   # lane-dense output width

    # --- batch tile selection (multiple of 16 for bf16 sublane packing) ---
    b16 = _round_up(B, 16)
    tile_b = max(16, min(tile_b, b16))
    # v7x: keep >= ~8 grid steps for large batches (2 TCs x pipeline depth).
    if b16 >= 8 * 256:
        tile_b = min(tile_b, _round_up(b16 // 8, 16))
    tile_b = _round_up(tile_b, 16)
    b_pad = _round_up(B, tile_b)

    # --- operand prep: bf16 matmul inputs, f32 biases, lane-dense zero padding ---
    x_p = x.astype(jnp.bfloat16)
    if b_pad != B:
        x_p = jnp.pad(x_p, ((0, b_pad - B), (0, 0)))

    w1 = params["w1"].astype(jnp.bfloat16)                             # (D_in, 128)
    b1 = params["b1"].astype(jnp.float32)                              # (1, 128)
    w2 = _pad2(params["w2"], 128, HIDDEN).astype(jnp.bfloat16)         # (128, 128)
    b2 = _pad2(params["b2"], 1, HIDDEN).astype(jnp.float32)            # (1, 128)
    w3 = _pad2(params["w3"], HIDDEN, HIDDEN).astype(jnp.bfloat16)      # (128, 128)
    b3 = _pad2(params["b3"], 1, HIDDEN).astype(jnp.float32)            # (1, 128)
    w4 = _pad2(params["w4"], HIDDEN, n_pad).astype(jnp.bfloat16)       # (128, n_pad)
    b4 = _pad2(params["b4"], 1, n_pad).astype(jnp.float32)             # (1, n_pad)

    operands = (x_p, w1, b1, w2, b2, w3, b3, w4, b4)
    grid = (b_pad // tile_b,)

    # x / out tiles march along the batch; weights & biases are VMEM-resident.
    def resident(a):
        return pl.BlockSpec(a.shape, lambda i: (0, 0))

    in_specs = [pl.BlockSpec((tile_b, input_dim), lambda i: (i, 0))] + \
               [resident(a) for a in operands[1:]]
    out_specs = pl.BlockSpec((tile_b, n_pad), lambda i: (i, 0))

    flops = 2 * b_pad * (input_dim * 128 + HIDDEN * HIDDEN
                         + HIDDEN * HIDDEN + HIDDEN * n_pad)
    bytes_accessed = sum(int(a.size) * a.dtype.itemsize for a in operands) \
        + b_pad * n_pad * 2                                            # bf16 output
    cost = pl.CostEstimate(flops=flops, transcendentals=0,
                           bytes_accessed=bytes_accessed)

    out_padded = pl.pallas_call(
        mlp_kernel,
        out_shape=jax.ShapeDtypeStruct((b_pad, n_pad), jnp.bfloat16),
        grid=grid,
        in_specs=in_specs,
        out_specs=out_specs,
        compiler_params=pltpu.CompilerParams(
            dimension_semantics=("parallel",)),
        cost_estimate=cost,
    )(*operands)

    return out_padded[:B, :num_classes].astype(jnp.float32)


def init_params(key, input_dim, num_classes):
    """Deterministic init matching the PyTorch module's layer shapes.
    Weights are stored transposed: (in_features, out_features)."""
    dims = [(input_dim, 128), (128, 64), (64, 32), (32, num_classes)]
    params = {}
    for idx, (fan_in, fan_out) in enumerate(dims, start=1):
        key, kw, kb = jax.random.split(key, 3)
        bound = 1.0 / jnp.sqrt(fan_in)  # PyTorch nn.Linear default uniform bound
        params[f"w{idx}"] = jax.random.uniform(
            kw, (fan_in, fan_out), jnp.float32, minval=-bound, maxval=bound)
        params[f"b{idx}"] = jax.random.uniform(
            kb, (1, fan_out), jnp.float32, minval=-bound, maxval=bound)
    return params


def reference_forward(x, params):
    """Pure-JAX reference mirroring the kernel's precision pattern
    (bf16 matmul inputs, f32 accumulation / bias / LeakyReLU, bf16 output store).
    Note: this deviates from a pure-f32 PyTorch forward by ~1e-2 relative error."""
    h = x.astype(jnp.bfloat16)
    for i in (1, 2, 3, 4):
        w = params[f"w{i}"].astype(jnp.bfloat16)
        b = params[f"b{i}"].astype(jnp.float32)
        h = jnp.dot(h, w, preferred_element_type=jnp.float32) + b
        if i < 4:
            h = jnp.where(h > 0, h, 0.1 * h).astype(jnp.bfloat16)
    return h.astype(jnp.bfloat16).astype(jnp.float32)


if __name__ == "__main__":
    key = jax.random.PRNGKey(0)
    B, input_dim, num_classes = 8, 16, 4

    key, kx = jax.random.split(key)
    x = jax.random.normal(kx, (B, input_dim), jnp.float32)
    params = init_params(key, input_dim, num_classes)

    out = disease_classifier_forward(x, params)
    out = jax.block_until_ready(out)

    ref = reference_forward(x, params)
    assert out.shape == (B, num_classes)
    assert jnp.allclose(out, ref, atol=1e-2, rtol=1e-2), "mismatch vs JAX reference"

    print("KERNEL_OK")
</pallas_src>

<mosaic_0001>
module attributes {stable_mosaic.version = 11 : i64} {
  func.func @mlp_kernel(%arg0: i32, %arg1: memref<16x16xbf16, #tpu.memory_space<vmem>>, %arg2: memref<16x128xbf16, #tpu.memory_space<vmem>>, %arg3: memref<1x128xf32, #tpu.memory_space<vmem>>, %arg4: memref<128x128xbf16, #tpu.memory_space<vmem>>, %arg5: memref<1x128xf32, #tpu.memory_space<vmem>>, %arg6: memref<128x128xbf16, #tpu.memory_space<vmem>>, %arg7: memref<1x128xf32, #tpu.memory_space<vmem>>, %arg8: memref<128x128xbf16, #tpu.memory_space<vmem>>, %arg9: memref<1x128xf32, #tpu.memory_space<vmem>>, %arg10: memref<16x128xbf16, #tpu.memory_space<vmem>>) attributes {dimension_semantics = [#tpu.dimension_semantics<parallel>], iteration_bounds = array<i64: 1>, scalar_prefetch = 0 : i64, scratch_operands = 0 : i64, tpu.core_type = #tpu.core_type<tc>, window_params = [{transform_indices = @transform_0, window_bounds = array<i64: 16, 16>}, {pipeline_mode = #tpu.pipeline_mode<synchronous>, transform_indices = @transform_1, window_bounds = array<i64: 16, 128>}, {pipeline_mode = #tpu.pipeline_mode<synchronous>, transform_indices = @transform_2, window_bounds = array<i64: 1, 128>}, {pipeline_mode = #tpu.pipeline_mode<synchronous>, transform_indices = @transform_3, window_bounds = array<i64: 128, 128>}, {pipeline_mode = #tpu.pipeline_mode<synchronous>, transform_indices = @transform_4, window_bounds = array<i64: 1, 128>}, {pipeline_mode = #tpu.pipeline_mode<synchronous>, transform_indices = @transform_5, window_bounds = array<i64: 128, 128>}, {pipeline_mode = #tpu.pipeline_mode<synchronous>, transform_indices = @transform_6, window_bounds = array<i64: 1, 128>}, {pipeline_mode = #tpu.pipeline_mode<synchronous>, transform_indices = @transform_7, window_bounds = array<i64: 128, 128>}, {pipeline_mode = #tpu.pipeline_mode<synchronous>, transform_indices = @transform_8, window_bounds = array<i64: 1, 128>}, {transform_indices = @transform_9, window_bounds = array<i64: 16, 128>}]} {
    %c0 = arith.constant 0 : index
    %c0_0 = arith.constant 0 : index
    %0 = vector.load %arg1[%c0, %c0_0] : memref<16x16xbf16, #tpu.memory_space<vmem>>, vector<16x16xbf16>
    %c0_1 = arith.constant 0 : index
    %c0_2 = arith.constant 0 : index
    %1 = vector.load %arg2[%c0_1, %c0_2] : memref<16x128xbf16, #tpu.memory_space<vmem>>, vector<16x128xbf16>
    %cst = arith.constant dense<0.000000e+00> : vector<16x128xf32>
    %2 = tpu.matmul %0, %1, %cst {dimension_numbers = #tpu.dot_dimension_numbers<[1], [0], [0], [1], [0, 0, 1, 1], [], []>} : vector<16x16xbf16>, vector<16x128xbf16>, vector<16x128xf32> -> vector<16x128xf32>
    %c0_3 = arith.constant 0 : index
    %c0_4 = arith.constant 0 : index
    %3 = vector.load %arg3[%c0_3, %c0_4] : memref<1x128xf32, #tpu.memory_space<vmem>>, vector<1x128xf32>
    %4 = vector.broadcast %3 : vector<1x128xf32> to vector<16x128xf32>
    %5 = arith.addf %2, %4 : vector<16x128xf32>
    %cst_5 = arith.constant 0.000000e+00 : f32
    %6 = vector.broadcast %cst_5 : f32 to vector<16x128xf32>
    %7 = arith.cmpf ogt, %5, %6 : vector<16x128xf32>
    %cst_6 = arith.constant 1.000000e-01 : f32
    %8 = vector.broadcast %cst_6 : f32 to vector<16x128xf32>
    %9 = arith.mulf %8, %5 : vector<16x128xf32>
    %10 = arith.select %7, %5, %9 : vector<16x128xi1>, vector<16x128xf32>
    %11 = arith.truncf %10 : vector<16x128xf32> to vector<16x128xbf16>
    %c0_7 = arith.constant 0 : index
    %c0_8 = arith.constant 0 : index
    %12 = vector.load %arg4[%c0_7, %c0_8] : memref<128x128xbf16, #tpu.memory_space<vmem>>, vector<128x128xbf16>
    %cst_9 = arith.constant dense<0.000000e+00> : vector<16x128xf32>
    %13 = tpu.matmul %11, %12, %cst_9 {dimension_numbers = #tpu.dot_dimension_numbers<[1], [0], [0], [1], [0, 0, 1, 1], [], []>} : vector<16x128xbf16>, vector<128x128xbf16>, vector<16x128xf32> -> vector<16x128xf32>
    %c0_10 = arith.constant 0 : index
    %c0_11 = arith.constant 0 : index
    %14 = vector.load %arg5[%c0_10, %c0_11] : memref<1x128xf32, #tpu.memory_space<vmem>>, vector<1x128xf32>
    %15 = vector.broadcast %14 : vector<1x128xf32> to vector<16x128xf32>
    %16 = arith.addf %13, %15 : vector<16x128xf32>
    %cst_12 = arith.constant 0.000000e+00 : f32
    %17 = vector.broadcast %cst_12 : f32 to vector<16x128xf32>
    %18 = arith.cmpf ogt, %16, %17 : vector<16x128xf32>
    %cst_13 = arith.constant 1.000000e-01 : f32
    %19 = vector.broadcast %cst_13 : f32 to vector<16x128xf32>
    %20 = arith.mulf %19, %16 : vector<16x128xf32>
    %21 = arith.select %18, %16, %20 : vector<16x128xi1>, vector<16x128xf32>
    %22 = arith.truncf %21 : vector<16x128xf32> to vector<16x128xbf16>
    %c0_14 = arith.constant 0 : index
    %c0_15 = arith.constant 0 : index
    %23 = vector.load %arg6[%c0_14, %c0_15] : memref<128x128xbf16, #tpu.memory_space<vmem>>, vector<128x128xbf16>
    %cst_16 = arith.constant dense<0.000000e+00> : vector<16x128xf32>
    %24 = tpu.matmul %22, %23, %cst_16 {dimension_numbers = #tpu.dot_dimension_numbers<[1], [0], [0], [1], [0, 0, 1, 1], [], []>} : vector<16x128xbf16>, vector<128x128xbf16>, vector<16x128xf32> -> vector<16x128xf32>
    %c0_17 = arith.constant 0 : index
    %c0_18 = arith.constant 0 : index
    %25 = vector.load %arg7[%c0_17, %c0_18] : memref<1x128xf32, #tpu.memory_space<vmem>>, vector<1x128xf32>
    %26 = vector.broadcast %25 : vector<1x128xf32> to vector<16x128xf32>
    %27 = arith.addf %24, %26 : vector<16x128xf32>
    %cst_19 = arith.constant 0.000000e+00 : f32
    %28 = vector.broadcast %cst_19 : f32 to vector<16x128xf32>
    %29 = arith.cmpf ogt, %27, %28 : vector<16x128xf32>
    %cst_20 = arith.constant 1.000000e-01 : f32
    %30 = vector.broadcast %cst_20 : f32 to vector<16x128xf32>
    %31 = arith.mulf %30, %27 : vector<16x128xf32>
    %32 = arith.select %29, %27, %31 : vector<16x128xi1>, vector<16x128xf32>
    %33 = arith.truncf %32 : vector<16x128xf32> to vector<16x128xbf16>
    %c0_21 = arith.constant 0 : index
    %c0_22 = arith.constant 0 : index
    %34 = vector.load %arg8[%c0_21, %c0_22] : memref<128x128xbf16, #tpu.memory_space<vmem>>, vector<128x128xbf16>
    %cst_23 = arith.constant dense<0.000000e+00> : vector<16x128xf32>
    %35 = tpu.matmul %33, %34, %cst_23 {dimension_numbers = #tpu.dot_dimension_numbers<[1], [0], [0], [1], [0, 0, 1, 1], [], []>} : vector<16x128xbf16>, vector<128x128xbf16>, vector<16x128xf32> -> vector<16x128xf32>
    %c0_24 = arith.constant 0 : index
    %c0_25 = arith.constant 0 : index
    %36 = vector.load %arg9[%c0_24, %c0_25] : memref<1x128xf32, #tpu.memory_space<vmem>>, vector<1x128xf32>
    %37 = vector.broadcast %36 : vector<1x128xf32> to vector<16x128xf32>
    %38 = arith.addf %35, %37 : vector<16x128xf32>
    %39 = arith.truncf %38 : vector<16x128xf32> to vector<16x128xbf16>
    %c0_26 = arith.constant 0 : index
    %c0_27 = arith.constant 0 : index
    %40 = vector.load %arg10[%c0_26, %c0_27] : memref<16x128xbf16, #tpu.memory_space<vmem>>, vector<16x128xbf16>
    tpu.vector_store %arg10[%c0_26, %c0_27], %39 {strides = array<i32>} : memref<16x128xbf16, #tpu.memory_space<vmem>>, vector<16x128xbf16>,
    return
  }
  func.func @transform_0(%arg0: i32) -> (i32, i32) {
    %c0_i32 = arith.constant 0 : i32
    %c0_i32_0 = arith.constant 0 : i32
    return %arg0, %c0_i32 : i32, i32
  }
  func.func @transform_1(%arg0: i32) -> (i32, i32) {
    %c0_i32 = arith.constant 0 : i32
    %c0_i32_0 = arith.constant 0 : i32
    %c0_i32_1 = arith.constant 0 : i32
    return %c0_i32, %c0_i32_0 : i32, i32
  }
  func.func @transform_2(%arg0: i32) -> (i32, i32) {
    %c0_i32 = arith.constant 0 : i32
    %c0_i32_0 = arith.constant 0 : i32
    %c0_i32_1 = arith.constant 0 : i32
    return %c0_i32, %c0_i32_0 : i32, i32
  }
  func.func @transform_3(%arg0: i32) -> (i32, i32) {
    %c0_i32 = arith.constant 0 : i32
    %c0_i32_0 = arith.constant 0 : i32
    %c0_i32_1 = arith.constant 0 : i32
    return %c0_i32, %c0_i32_0 : i32, i32
  }
  func.func @transform_4(%arg0: i32) -> (i32, i32) {
    %c0_i32 = arith.constant 0 : i32
    %c0_i32_0 = arith.constant 0 : i32
    %c0_i32_1 = arith.constant 0 : i32
    return %c0_i32, %c0_i32_0 : i32, i32
  }
  func.func @transform_5(%arg0: i32) -> (i32, i32) {
    %c0_i32 = arith.constant 0 : i32
    %c0_i32_0 = arith.constant 0 : i32
    %c0_i32_1 = arith.constant 0 : i32
    return %c0_i32, %c0_i32_0 : i32, i32
  }
  func.func @transform_6(%arg0: i32) -> (i32, i32) {
    %c0_i32 = arith.constant 0 : i32
    %c0_i32_0 = arith.constant 0 : i32
    %c0_i32_1 = arith.constant 0 : i32
    return %c0_i32, %c0_i32_0 : i32, i32
  }
  func.func @transform_7(%arg0: i32) -> (i32, i32) {
    %c0_i32 = arith.constant 0 : i32
    %c0_i32_0 = arith.constant 0 : i32
    %c0_i32_1 = arith.constant 0 : i32
    return %c0_i32, %c0_i32_0 : i32, i32
  }
  func.func @transform_8(%arg0: i32) -> (i32, i32) {
    %c0_i32 = arith.constant 0 : i32
    %c0_i32_0 = arith.constant 0 : i32
    %c0_i32_1 = arith.constant 0 : i32
    return %c0_i32, %c0_i32_0 : i32, i32
  }
  func.func @transform_9(%arg0: i32) -> (i32, i32) {
    %c0_i32 = arith.constant 0 : i32
    %c0_i32_0 = arith.constant 0 : i32
    return %arg0, %c0_i32 : i32, i32
  }
}

</mosaic_0001>

<llo_original>
// kernel: tpu_custom_call.1
$region0: #{tpu_custom_call.1}
  #allocation0 [shape = 'u32[]', space=smem, size = 0x4, offset = 0x4, fixed_abs, tag = 'smem constant byte address 0x4 - core index']
  #allocation1 [shape = 'u32[144,128]{1,0:T(1,128)}', space=vmem, size = 0x12000, scoped, tag = 'internal scratch']
  %s0 = inlined_call_operand.hbm [shape: bf16[16,16], index: 0, kind: input, shape index: {}]
  %s1 = inlined_call_operand.hbm [shape: bf16[16,128], index: 1, kind: input, shape index: {}]
  %s2 = inlined_call_operand.vmem [shape: f32[1,128], index: 2, kind: input, shape index: {}]
  %s3 = inlined_call_operand.hbm [shape: bf16[128,128], index: 3, kind: input, shape index: {}]
  %s4 = inlined_call_operand.vmem [shape: f32[1,128], index: 4, kind: input, shape index: {}]
  %s5 = inlined_call_operand.hbm [shape: bf16[128,128], index: 5, kind: input, shape index: {}]
  %s6 = inlined_call_operand.vmem [shape: f32[1,128], index: 6, kind: input, shape index: {}]
  %s7 = inlined_call_operand.hbm [shape: bf16[128,128], index: 7, kind: input, shape index: {}]
  %s8 = inlined_call_operand.vmem [shape: f32[1,128], index: 8, kind: input, shape index: {}]
  %s9 = inlined_call_operand.hbm [shape: bf16[16,128], index: 9, kind: output, shape index: {}]
  %s10 = sld [smem:[#allocation0]]
  $region66: #{tpu_custom_call.1} parent=0
    _
  %s12 = ssub.s32 1, %s10
  %s13 = scalar_select 0, %s12, %s10
  $region1: #{tpu_custom_call.1} parent=0
    #allocation2 [shape = 'u8[4096]{0}', space=vmem, size = 0x1000, scoped, tag = 'input window, operand 0, single buffered']
    #allocation3 [shape = 's32[1]{0}', space=sflag, size = 0x4, scoped, tag = 'scoped memory for tpu_custom_call.1']
    #allocation4 [shape = 's32[1]{0}', space=sflag, size = 0x4, scoped, tag = 'scoped memory for tpu_custom_call.1']
    #allocation5 [shape = 'u8[4096]{0}', space=vmem, size = 0x1000, scoped, tag = 'input window, operand 1, single buffered']
    #allocation6 [shape = 's32[1]{0}', space=sflag, size = 0x4, scoped, tag = 'scoped memory for tpu_custom_call.1']
    #allocation7 [shape = 'u8[32768]{0}', space=vmem, size = 0x8000, scoped, tag = 'input window, operand 3, single buffered']
    #allocation8 [shape = 'u8[32768]{0}', space=vmem, size = 0x8000, scoped, tag = 'input window, operand 5, single buffered']
    #allocation9 [shape = 's32[1]{0}', space=sflag, size = 0x4, scoped, tag = 'scoped memory for tpu_custom_call.1']
    #allocation10 [shape = 'u8[32768]{0}', space=vmem, size = 0x8000, scoped, tag = 'input window, operand 7, single buffered']
    #allocation11 [shape = 'u8[4096]{0}', space=vmem, size = 0x1000, scoped, tag = 'output window, operand 0, single buffered']
    %14 = vsyncpa [#allocation3], 0
    %15 = vsyncpa [#allocation6], 0
    %16 = vsyncpa [#allocation9], 0
    %17 = vsyncpa [#allocation4], 0
    // Predicated region
    $region2: #{tpu_custom_call.1} parent=1 // pred_check
      _
    $region3: #{tpu_custom_call.1} parent=1 // pred_check_branch
      %19 = sbr.rel (0) target = $region5
    $region4: #{tpu_custom_call.1} parent=1 // pred_region
      %s21 = ssub.s32 128, 128
      %22 = vsyncadd [#allocation3], %s21
      %s23 = sshll.u32 [#allocation2], 4
      %s24 = int_to_ptr.vmem [resolvable:$true] %s23
      %29 = dma.hbm_to_vmem [thread:$0]  %s0, 128, %s24, [#allocation3], 64, 64, 4
    $region5: #{tpu_custom_call.1} parent=1 // pred_fallthru
      _
    // Predicated region
    $region6: #{tpu_custom_call.1} parent=1 // pred_check
      _
    $region7: #{tpu_custom_call.1} parent=1 // pred_check_branch
      %31 = sbr.rel (0) target = $region9
    $region8: #{tpu_custom_call.1} parent=1 // pred_region
      %s33 = ssub.s32 128, 128
      %34 = vsyncadd [#allocation6], %s33
      %s35 = sshll.u32 [#allocation5], 4
      %s36 = int_to_ptr.vmem [resolvable:$true] %s35
      %41 = dma.hbm_to_vmem [thread:$0]  %s1, 128, %s36, [#allocation6], 64, 64, 4
    $region9: #{tpu_custom_call.1} parent=1 // pred_fallthru
      _
    // Predicated region
    $region10: #{tpu_custom_call.1} parent=1 // pred_check
      _
    $region11: #{tpu_custom_call.1} parent=1 // pred_check_branch
      %43 = sbr.rel (0) target = $region13
    $region12: #{tpu_custom_call.1} parent=1 // pred_region
      _
    $region13: #{tpu_custom_call.1} parent=1 // pred_fallthru
      _
    // Predicated region
    $region14: #{tpu_custom_call.1} parent=1 // pred_check
      _
    $region15: #{tpu_custom_call.1} parent=1 // pred_check_branch
      %45 = sbr.rel (0) target = $region17
    $region16: #{tpu_custom_call.1} parent=1 // pred_region
      %s47 = ssub.s32 1024, 1024
      %48 = vsyncadd [#allocation6], %s47
      %s49 = sshll.u32 [#allocation7], 4
      %s50 = int_to_ptr.vmem [resolvable:$true] %s49
      %55 = dma.hbm_to_vmem [thread:$0]  %s3, 1024, %s50, [#allocation6], 64, 64, 4
    $region17: #{tpu_custom_call.1} parent=1 // pred_fallthru
      _
    // Predicated region
    $region18: #{tpu_custom_call.1} parent=1 // pred_check
      _
    $region19: #{tpu_custom_call.1} parent=1 // pred_check_branch
      %57 = sbr.rel (0) target = $region21
    $region20: #{tpu_custom_call.1} parent=1 // pred_region
      _
    $region21: #{tpu_custom_call.1} parent=1 // pred_fallthru
      _
    // Predicated region
    $region22: #{tpu_custom_call.1} parent=1 // pred_check
      _
    $region23: #{tpu_custom_call.1} parent=1 // pred_check_branch
      %59 = sbr.rel (0) target = $region25
    $region24: #{tpu_custom_call.1} parent=1 // pred_region
      %s61 = ssub.s32 1024, 1024
      %62 = vsyncadd [#allocation9], %s61
      %s63 = sshll.u32 [#allocation8], 4
      %s64 = int_to_ptr.vmem [resolvable:$true] %s63
      %69 = dma.hbm_to_vmem [thread:$0]  %s5, 1024, %s64, [#allocation9], 64, 64, 4
    $region25: #{tpu_custom_call.1} parent=1 // pred_fallthru
      _
    // Predicated region
    $region26: #{tpu_custom_call.1} parent=1 // pred_check
      _
    $region27: #{tpu_custom_call.1} parent=1 // pred_check_branch
      %71 = sbr.rel (0) target = $region29
    $region28: #{tpu_custom_call.1} parent=1 // pred_region
      _
    $region29: #{tpu_custom_call.1} parent=1 // pred_fallthru
      _
    // Predicated region
    $region30: #{tpu_custom_call.1} parent=1 // pred_check
      _
    $region31: #{tpu_custom_call.1} parent=1 // pred_check_branch
      %73 = sbr.rel (0) target = $region33
    $region32: #{tpu_custom_call.1} parent=1 // pred_region
      %s75 = ssub.s32 1024, 1024
      %76 = vsyncadd [#allocation9], %s75
      %s77 = sshll.u32 [#allocation10], 4
      %s78 = int_to_ptr.vmem [resolvable:$true] %s77
      %83 = dma.hbm_to_vmem [thread:$0]  %s7, 1024, %s78, [#allocation9], 64, 64, 4
    $region33: #{tpu_custom_call.1} parent=1 // pred_fallthru
      _
    // Predicated region
    $region34: #{tpu_custom_call.1} parent=1 // pred_check
      _
    $region35: #{tpu_custom_call.1} parent=1 // pred_check_branch
      %85 = sbr.rel (0) target = $region37
    $region36: #{tpu_custom_call.1} parent=1 // pred_region
      _
    $region37: #{tpu_custom_call.1} parent=1 // pred_fallthru
      _
    // Predicated region
    $region38: #{tpu_custom_call.1} parent=1 // pred_check
      _
    $region39: #{tpu_custom_call.1} parent=1 // pred_check_branch
      %87 = sbr.rel (0) target = $region41
    $region40: #{tpu_custom_call.1} parent=1 // pred_region
      %88 = dma.done [#allocation3], 128
    $region41: #{tpu_custom_call.1} parent=1 // pred_fallthru
      _
    // Predicated region
    $region42: #{tpu_custom_call.1} parent=1 // pred_check
      _
    $region43: #{tpu_custom_call.1} parent=1 // pred_check_branch
      %90 = sbr.rel (0) target = $region45
    $region44: #{tpu_custom_call.1} parent=1 // pred_region
      %91 = dma.done [#allocation6], 128
    $region45: #{tpu_custom_call.1} parent=1 // pred_fallthru
      _
    // Predicated region
    $region46: #{tpu_custom_call.1} parent=1 // pred_check
      _
    $region47: #{tpu_custom_call.1} parent=1 // pred_check_branch
      %93 = sbr.rel (0) target = $region49
    $region48: #{tpu_custom_call.1} parent=1 // pred_region
      %94 = dma.done [#allocation6], 1024
    $region49: #{tpu_custom_call.1} parent=1 // pred_fallthru
      _
    // Predicated region
    $region50: #{tpu_custom_call.1} parent=1 // pred_check
      _
    $region51: #{tpu_custom_call.1} parent=1 // pred_check_branch
      %96 = sbr.rel (0) target = $region53
    $region52: #{tpu_custom_call.1} parent=1 // pred_region
      %97 = dma.done [#allocation9], 1024
    $region53: #{tpu_custom_call.1} parent=1 // pred_fallthru
      _
    // Predicated region
    $region54: #{tpu_custom_call.1} parent=1 // pred_check
      _
    $region55: #{tpu_custom_call.1} parent=1 // pred_check_branch
      %99 = sbr.rel (0) target = $region57
    $region56: #{tpu_custom_call.1} parent=1 // pred_region
      %100 = dma.done [#allocation9], 1024
    $region57: #{tpu_custom_call.1} parent=1 // pred_fallthru
      _
    %v102 = vld [vmem:[#allocation2] sm:$0xf]
    %v103 = vld [vmem:[#allocation2 + $0x4] sm:$0xf]
    %v104 = vld [vmem:[#allocation5] sm:$0xf]
    %v105 = vld [vmem:[#allocation5 + $0x4] sm:$0xf]
    %v106 = vld [vmem:[%s2] sm:$0x1]
    %v108 = vlaneseq
    %v109 = vshrl.u32 %v108, 7
    %v110 = vsub.s32 0, %v109
    %v111 = vrot.slane %v106, %v110
    %v115 = vunpack.c.l.b16 %v102
    %v116 = vunpack.c.l.b16 %v103
    %v117 = vpack.c.b16 %v116, %v115
    %v120 = vunpack.c.l.b16 %v104
    %v121 = vunpack.c.l.b16 %v105
    %v122 = vpack.c.b16 %v121, %v120
    %vm124 = vcmask 130048
    %v126 = vsel %vm124, %v117, 0
    %128 = vmatprep.subr.bf16.mxu0 0
    %129 = vmatpush1.bf16.msra.mxu0 0
    %130 = vmatprep.subr.bf16.mxu0 0
    %131 = vmatpush1.bf16.msra.mxu0 0
    %132 = vmatprep.subr.bf16.mxu0 0
    %133 = vmatpush1.bf16.msra.mxu0 0
    %134 = vmatprep.subr.bf16.mxu0 0
    %135 = vmatpush1.bf16.msra.mxu0 0
    %136 = vmatprep.subr.bf16.mxu0 0
    %137 = vmatpush1.bf16.msra.mxu0 0
    %138 = vmatprep.subr.bf16.mxu0 0
    %139 = vmatpush1.bf16.msra.mxu0 0
    %140 = vmatprep.subr.bf16.mxu0 0
    %141 = vmatpush1.bf16.msra.mxu0 0
    %142 = vmatprep.subr.bf16.mxu0 0
    %143 = vmatpush1.bf16.msra.mxu0 %v122
    %144 = vmatprep.subr.bf16.mxu0 0
    %145 = vmatpush2.bf16.msra.mxu0 0
    %146 = vmatprep.subr.bf16.mxu0 0
    %147 = vmatpush2.bf16.msra.mxu0 0
    %148 = vmatprep.subr.bf16.mxu0 0
    %149 = vmatpush2.bf16.msra.mxu0 0
    %150 = vmatprep.subr.bf16.mxu0 0
    %151 = vmatpush2.bf16.msra.mxu0 0
    %152 = vmatprep.subr.bf16.mxu0 0
    %153 = vmatpush2.bf16.msra.mxu0 0
    %154 = vmatprep.subr.bf16.mxu0 0
    %155 = vmatpush2.bf16.msra.mxu0 0
    %156 = vmatprep.subr.bf16.mxu0 0
    %157 = vmatpush2.bf16.msra.mxu0 0
    %158 = vmatprep.subr.bf16.mxu0 0
    %159 = vmatpush2.bf16.msra.mxu0 0
    %160 = vmatprep.mubr.bf16.mxu0 0
    %161 = vmatmul.mubr.bf16.gmra.mxu0 %v126
    %v162 = vpop.f32.mrf.mxu0
    %v163 = vadd.f32 %v111, %v162
    %v164 = vpop.f32.mrf.mxu0
    %v165 = vpop.f32.mrf.mxu0
    %v166 = vadd.f32 %v111, %v165
    %v167 = vpop.f32.mrf.mxu0
    %168 = vdwg.mxu0
    %vm169 = vcmp.gt.f32.partialorder %v163, 0.0
    %vm170 = vcmp.gt.f32.partialorder %v166, 0.0
    %v171 = vmul.f32 %v163, 0.1
    %v172 = vmul.f32 %v166, 0.1
    %v173 = vsel %vm169, %v163, %v171
    %v174 = vsel %vm170, %v166, %v172
    %v175 = vpack.c.bf16 %v174, %v173
    %v176 = vld [vmem:[#allocation7] sm:$0xf]
    %v177 = vld [vmem:[#allocation7 + $0x4] sm:$0xf]
    %v178 = vld [vmem:[#allocation7 + $0x8] sm:$0xf]
    %v179 = vld [vmem:[#allocation7 + $0xc] sm:$0xf]
    %v180 = vld [vmem:[#allocation7 + $0x10] sm:$0xf]
    %v181 = vld [vmem:[#allocation7 + $0x14] sm:$0xf]
    %v182 = vld [vmem:[#allocation7 + $0x18] sm:$0xf]
    %v183 = vld [vmem:[#allocation7 + $0x1c] sm:$0xf]
    %v184 = vld [vmem:[#allocation7 + $0x20] sm:$0xf]
    %v185 = vld [vmem:[#allocation7 + $0x24] sm:$0xf]
    %v186 = vld [vmem:[#allocation7 + $0x28] sm:$0xf]
    %v187 = vld [vmem:[#allocation7 + $0x2c] sm:$0xf]
    %v188 = vld [vmem:[#allocation7 + $0x30] sm:$0xf]
    %v189 = vld [vmem:[#allocation7 + $0x34] sm:$0xf]
    %v190 = vld [vmem:[#allocation7 + $0x38] sm:$0xf]
    %v191 = vld [vmem:[#allocation7 + $0x3c] sm:$0xf]
    %v192 = vld [vmem:[%s4] sm:$0x1]
    %v194 = vlaneseq
    %v195 = vshrl.u32 %v194, 7
    %v196 = vsub.s32 0, %v195
    %v197 = vrot.slane %v192, %v196
    %v215 = vunpack.c.l.b16 %v176
    %v216 = vunpack.c.l.b16 %v177
    %v217 = vunpack.c.l.b16 %v178
    %v218 = vunpack.c.l.b16 %v179
    %v219 = vunpack.c.l.b16 %v180
    %v220 = vunpack.c.l.b16 %v181
    %v221 = vunpack.c.l.b16 %v182
    %v222 = vunpack.c.l.b16 %v183
    %v223 = vunpack.c.l.b16 %v184
    %v224 = vunpack.c.l.b16 %v185
    %v225 = vunpack.c.l.b16 %v186
    %v226 = vunpack.c.l.b16 %v187
    %v227 = vunpack.c.l.b16 %v188
    %v228 = vunpack.c.l.b16 %v189
    %v229 = vunpack.c.l.b16 %v190
    %v230 = vunpack.c.l.b16 %v191
    %v231 = vpack.c.b16 %v216, %v215
    %v232 = vpack.c.b16 %v218, %v217
    %v233 = vpack.c.b16 %v220, %v219
    %v234 = vpack.c.b16 %v222, %v221
    %v235 = vpack.c.b16 %v224, %v223
    %v236 = vpack.c.b16 %v226, %v225
    %v237 = vpack.c.b16 %v228, %v227
    %v238 = vpack.c.b16 %v230, %v229
    %247 = vmatprep.subr.bf16.mxu0 0
    %248 = vmatpush1.bf16.msra.mxu0 %v238
    %249 = vmatprep.subr.bf16.mxu0 0
    %250 = vmatpush1.bf16.msra.mxu0 %v237
    %251 = vmatprep.subr.bf16.mxu0 0
    %252 = vmatpush1.bf16.msra.mxu0 %v236
    %253 = vmatprep.subr.bf16.mxu0 0
    %254 = vmatpush1.bf16.msra.mxu0 %v235
    %255 = vmatprep.subr.bf16.mxu0 0
    %256 = vmatpush1.bf16.msra.mxu0 %v234
    %257 = vmatprep.subr.bf16.mxu0 0
    %258 = vmatpush1.bf16.msra.mxu0 %v233
    %259 = vmatprep.subr.bf16.mxu0 0
    %260 = vmatpush1.bf16.msra.mxu0 %v232
    %261 = vmatprep.subr.bf16.mxu0 0
    %262 = vmatpush1.bf16.msra.mxu0 %v231
    %263 = vmatprep.subr.bf16.mxu0 0
    %264 = vmatpush2.bf16.msra.mxu0 0
    %265 = vmatprep.subr.bf16.mxu0 0
    %266 = vmatpush2.bf16.msra.mxu0 0
    %267 = vmatprep.subr.bf16.mxu0 0
    %268 = vmatpush2.bf16.msra.mxu0 0
    %269 = vmatprep.subr.bf16.mxu0 0
    %270 = vmatpush2.bf16.msra.mxu0 0
    %271 = vmatprep.subr.bf16.mxu0 0
    %272 = vmatpush2.bf16.msra.mxu0 0
    %273 = vmatprep.subr.bf16.mxu0 0
    %274 = vmatpush2.bf16.msra.mxu0 0
    %275 = vmatprep.subr.bf16.mxu0 0
    %276 = vmatpush2.bf16.msra.mxu0 0
    %277 = vmatprep.subr.bf16.mxu0 0
    %278 = vmatpush2.bf16.msra.mxu0 0
    %279 = vmatprep.mubr.bf16.mxu0 0
    %280 = vmatmul.mubr.bf16.gmra.mxu0 %v175
    %v281 = vpop.f32.mrf.mxu0
    %v282 = vadd.f32 %v197, %v281
    %v283 = vpop.f32.mrf.mxu0
    %v284 = vpop.f32.mrf.mxu0
    %v285 = vadd.f32 %v197, %v284
    %v286 = vpop.f32.mrf.mxu0
    %287 = vdwg.mxu0
    %vm288 = vcmp.gt.f32.partialorder %v282, 0.0
    %vm289 = vcmp.gt.f32.partialorder %v285, 0.0
    %v290 = vmul.f32 %v282, 0.1
    %v291 = vmul.f32 %v285, 0.1
    %v292 = vsel %vm288, %v282, %v290
    %v293 = vsel %vm289, %v285, %v291
    %v294 = vpack.c.bf16 %v293, %v292
    %v295 = vld [vmem:[#allocation8] sm:$0xf]
    %v296 = vld [vmem:[#allocation8 + $0x4] sm:$0xf]
    %v297 = vld [vmem:[#allocation8 + $0x8] sm:$0xf]
    %v298 = vld [vmem:[#allocation8 + $0xc] sm:$0xf]
    %v299 = vld [vmem:[#allocation8 + $0x10] sm:$0xf]
    %v300 = vld [vmem:[#allocation8 + $0x14] sm:$0xf]
    %v301 = vld [vmem:[#allocation8 + $0x18] sm:$0xf]
    %v302 = vld [vmem:[#allocation8 + $0x1c] sm:$0xf]
    %v303 = vld [vmem:[#allocation8 + $0x20] sm:$0xf]
    %v304 = vld [vmem:[#allocation8 + $0x24] sm:$0xf]
    %v305 = vld [vmem:[#allocation8 + $0x28] sm:$0xf]
    %v306 = vld [vmem:[#allocation8 + $0x2c] sm:$0xf]
    %v307 = vld [vmem:[#allocation8 + $0x30] sm:$0xf]
    %v308 = vld [vmem:[#allocation8 + $0x34] sm:$0xf]
    %v309 = vld [vmem:[#allocation8 + $0x38] sm:$0xf]
    %v310 = vld [vmem:[#allocation8 + $0x3c] sm:$0xf]
    %v311 = vld [vmem:[%s6] sm:$0x1]
    %v313 = vlaneseq
    %v314 = vshrl.u32 %v313, 7
    %v315 = vsub.s32 0, %v314
    %v316 = vrot.slane %v311, %v315
    %v334 = vunpack.c.l.b16 %v295
    %v335 = vunpack.c.l.b16 %v296
    %v336 = vunpack.c.l.b16 %v297
    %v337 = vunpack.c.l.b16 %v298
    %v338 = vunpack.c.l.b16 %v299
    %v339 = vunpack.c.l.b16 %v300
    %v340 = vunpack.c.l.b16 %v301
    %v341 = vunpack.c.l.b16 %v302
    %v342 = vunpack.c.l.b16 %v303
    %v343 = vunpack.c.l.b16 %v304
    %v344 = vunpack.c.l.b16 %v305
    %v345 = vunpack.c.l.b16 %v306
    %v346 = vunpack.c.l.b16 %v307
    %v347 = vunpack.c.l.b16 %v308
    %v348 = vunpack.c.l.b16 %v309
    %v349 = vunpack.c.l.b16 %v310
    %v350 = vpack.c.b16 %v335, %v334
    %v351 = vpack.c.b16 %v337, %v336
    %v352 = vpack.c.b16 %v339, %v338
    %v353 = vpack.c.b16 %v341, %v340
    %v354 = vpack.c.b16 %v343, %v342
    %v355 = vpack.c.b16 %v345, %v344
    %v356 = vpack.c.b16 %v347, %v346
    %v357 = vpack.c.b16 %v349, %v348
    %366 = vmatprep.subr.bf16.mxu0 0
    %367 = vmatpush1.bf16.msra.mxu0 %v357
    %368 = vmatprep.subr.bf16.mxu0 0
    %369 = vmatpush1.bf16.msra.mxu0 %v356
    %370 = vmatprep.subr.bf16.mxu0 0
    %371 = vmatpush1.bf16.msra.mxu0 %v355
    %372 = vmatprep.subr.bf16.mxu0 0
    %373 = vmatpush1.bf16.msra.mxu0 %v354
    %374 = vmatprep.subr.bf16.mxu0 0
    %375 = vmatpush1.bf16.msra.mxu0 %v353
    %376 = vmatprep.subr.bf16.mxu0 0
    %377 = vmatpush1.bf16.msra.mxu0 %v352
    %378 = vmatprep.subr.bf16.mxu0 0
    %379 = vmatpush1.bf16.msra.mxu0 %v351
    %380 = vmatprep.subr.bf16.mxu0 0
    %381 = vmatpush1.bf16.msra.mxu0 %v350
    %382 = vmatprep.subr.bf16.mxu0 0
    %383 = vmatpush2.bf16.msra.mxu0 0
    %384 = vmatprep.subr.bf16.mxu0 0
    %385 = vmatpush2.bf16.msra.mxu0 0
    %386 = vmatprep.subr.bf16.mxu0 0
    %387 = vmatpush2.bf16.msra.mxu0 0
    %388 = vmatprep.subr.bf16.mxu0 0
    %389 = vmatpush2.bf16.msra.mxu0 0
    %390 = vmatprep.subr.bf16.mxu0 0
    %391 = vmatpush2.bf16.msra.mxu0 0
    %392 = vmatprep.subr.bf16.mxu0 0
    %393 = vmatpush2.bf16.msra.mxu0 0
    %394 = vmatprep.subr.bf16.mxu0 0
    %395 = vmatpush2.bf16.msra.mxu0 0
    %396 = vmatprep.subr.bf16.mxu0 0
    %397 = vmatpush2.bf16.msra.mxu0 0
    %398 = vmatprep.mubr.bf16.mxu0 0
    %399 = vmatmul.mubr.bf16.gmra.mxu0 %v294
    %v400 = vpop.f32.mrf.mxu0
    %v401 = vadd.f32 %v316, %v400
    %v402 = vpop.f32.mrf.mxu0
    %v403 = vpop.f32.mrf.mxu0
    %v404 = vadd.f32 %v316, %v403
    %v405 = vpop.f32.mrf.mxu0
    %406 = vdwg.mxu0
    %vm407 = vcmp.gt.f32.partialorder %v401, 0.0
    %vm408 = vcmp.gt.f32.partialorder %v404, 0.0
    %v409 = vmul.f32 %v401, 0.1
    %v410 = vmul.f32 %v404, 0.1
    %v411 = vsel %vm407, %v401, %v409
    %v412 = vsel %vm408, %v404, %v410
    %v413 = vpack.c.bf16 %v412, %v411
    %v414 = vld [vmem:[#allocation10] sm:$0xf]
    %v415 = vld [vmem:[#allocation10 + $0x4] sm:$0xf]
    %v416 = vld [vmem:[#allocation10 + $0x8] sm:$0xf]
    %v417 = vld [vmem:[#allocation10 + $0xc] sm:$0xf]
    %v418 = vld [vmem:[#allocation10 + $0x10] sm:$0xf]
    %v419 = vld [vmem:[#allocation10 + $0x14] sm:$0xf]
    %v420 = vld [vmem:[#allocation10 + $0x18] sm:$0xf]
    %v421 = vld [vmem:[#allocation10 + $0x1c] sm:$0xf]
    %v422 = vld [vmem:[#allocation10 + $0x20] sm:$0xf]
    %v423 = vld [vmem:[#allocation10 + $0x24] sm:$0xf]
    %v424 = vld [vmem:[#allocation10 + $0x28] sm:$0xf]
    %v425 = vld [vmem:[#allocation10 + $0x2c] sm:$0xf]
    %v426 = vld [vmem:[#allocation10 + $0x30] sm:$0xf]
    %v427 = vld [vmem:[#allocation10 + $0x34] sm:$0xf]
    %v428 = vld [vmem:[#allocation10 + $0x38] sm:$0xf]
    %v429 = vld [vmem:[#allocation10 + $0x3c] sm:$0xf]
    %v430 = vld [vmem:[%s8] sm:$0x1]
    %v432 = vlaneseq
    %v433 = vshrl.u32 %v432, 7
    %v434 = vsub.s32 0, %v433
    %v435 = vrot.slane %v430, %v434
    %v453 = vunpack.c.l.b16 %v414
    %v454 = vunpack.c.l.b16 %v415
    %v455 = vunpack.c.l.b16 %v416
    %v456 = vunpack.c.l.b16 %v417
    %v457 = vunpack.c.l.b16 %v418
    %v458 = vunpack.c.l.b16 %v419
    %v459 = vunpack.c.l.b16 %v420
    %v460 = vunpack.c.l.b16 %v421
    %v461 = vunpack.c.l.b16 %v422
    %v462 = vunpack.c.l.b16 %v423
    %v463 = vunpack.c.l.b16 %v424
    %v464 = vunpack.c.l.b16 %v425
    %v465 = vunpack.c.l.b16 %v426
    %v466 = vunpack.c.l.b16 %v427
    %v467 = vunpack.c.l.b16 %v428
    %v468 = vunpack.c.l.b16 %v429
    %v469 = vpack.c.b16 %v454, %v453
    %v470 = vpack.c.b16 %v456, %v455
    %v471 = vpack.c.b16 %v458, %v457
    %v472 = vpack.c.b16 %v460, %v459
    %v473 = vpack.c.b16 %v462, %v461
    %v474 = vpack.c.b16 %v464, %v463
    %v475 = vpack.c.b16 %v466, %v465
    %v476 = vpack.c.b16 %v468, %v467
    %485 = vmatprep.subr.bf16.mxu0 0
    %486 = vmatpush1.bf16.msra.mxu0 %v476
    %487 = vmatprep.subr.bf16.mxu0 0
    %488 = vmatpush1.bf16.msra.mxu0 %v475
    %489 = vmatprep.subr.bf16.mxu0 0
    %490 = vmatpush1.bf16.msra.mxu0 %v474
    %491 = vmatprep.subr.bf16.mxu0 0
    %492 = vmatpush1.bf16.msra.mxu0 %v473
    %493 = vmatprep.subr.bf16.mxu0 0
    %494 = vmatpush1.bf16.msra.mxu0 %v472
    %495 = vmatprep.subr.bf16.mxu0 0
    %496 = vmatpush1.bf16.msra.mxu0 %v471
    %497 = vmatprep.subr.bf16.mxu0 0
    %498 = vmatpush1.bf16.msra.mxu0 %v470
    %499 = vmatprep.subr.bf16.mxu0 0
    %500 = vmatpush1.bf16.msra.mxu0 %v469
    %501 = vmatprep.subr.bf16.mxu0 0
    %502 = vmatpush2.bf16.msra.mxu0 0
    %503 = vmatprep.subr.bf16.mxu0 0
    %504 = vmatpush2.bf16.msra.mxu0 0
    %505 = vmatprep.subr.bf16.mxu0 0
    %506 = vmatpush2.bf16.msra.mxu0 0
    %507 = vmatprep.subr.bf16.mxu0 0
    %508 = vmatpush2.bf16.msra.mxu0 0
    %509 = vmatprep.subr.bf16.mxu0 0
    %510 = vmatpush2.bf16.msra.mxu0 0
    %511 = vmatprep.subr.bf16.mxu0 0
    %512 = vmatpush2.bf16.msra.mxu0 0
    %513 = vmatprep.subr.bf16.mxu0 0
    %514 = vmatpush2.bf16.msra.mxu0 0
    %515 = vmatprep.subr.bf16.mxu0 0
    %516 = vmatpush2.bf16.msra.mxu0 0
    %517 = vmatprep.mubr.bf16.mxu0 0
    %518 = vmatmul.mubr.bf16.gmra.mxu0 %v413
    %v519 = vpop.f32.mrf.mxu0
    %v520 = vadd.f32 %v435, %v519
    %v521 = vpop.f32.mrf.mxu0
    %v522 = vpop.f32.mrf.mxu0
    %v523 = vadd.f32 %v435, %v522
    %v524 = vpop.f32.mrf.mxu0
    %525 = vdwg.mxu0
    %v526 = vpack.c.bf16 %v523, %v520
    %v528 = vunpack.c.l.b16 %v526
    %v529 = vunpack.c.h.b16 %v526
    %v530 = vpack.c.b16 %v528, %v528
    %v531 = vpack.c.b16 %v529, %v529
    %534 = vst [vmem:[#allocation11] sm:$0xf] %v530
    %535 = vst [vmem:[#allocation11 + $0x4] sm:$0xf] %v531
    // Predicated region
    $region58: #{tpu_custom_call.1} parent=1 // pred_check
      _
    $region59: #{tpu_custom_call.1} parent=1 // pred_check_branch
      %537 = sbr.rel (0) target = $region61
    $region60: #{tpu_custom_call.1} parent=1 // pred_region
      %s539 = ssub.s32 128, 128
      %540 = vsyncadd [#allocation4], %s539
      %s541 = sshll.u32 [#allocation11], 4
      %s542 = int_to_ptr.vmem [resolvable:$true] %s541
      %547 = dma.vmem_to_hbm [thread:$0]  %s542, 128, %s9, [#allocation4], 64, 64, 4
    $region61: #{tpu_custom_call.1} parent=1 // pred_fallthru
      _
    // Predicated region
    $region62: #{tpu_custom_call.1} parent=1 // pred_check
      _
    $region63: #{tpu_custom_call.1} parent=1 // pred_check_branch
      %549 = sbr.rel (0) target = $region65
    $region64: #{tpu_custom_call.1} parent=1 // pred_region
      %550 = dma.done [#allocation4], 128
    $region65: #{tpu_custom_call.1} parent=1 // pred_fallthru
      _
    %551 = vsyncpa [#allocation3], 1
    %552 = vsyncpa [#allocation6], 1
    %553 = vsyncpa [#allocation9], 1
    %554 = vsyncpa [#allocation4], 1

</llo_original>
